<compile_context>
chip_gen: v5e
topology: v5e:2x2
jax: 0.10.0
libtpu: 0.0.40
codegen_flags: <defaults>
</compile_context>

<pallas_src>
import jax
import jax.numpy as jnp
from jax.experimental import pallas as pl
from jax.experimental.pallas import tpu as pltpu


def fused_mlp_kernel(x_ref, aw_ref, ab_ref, bw_ref, bb_ref, o_ref):
    # x_ref : [in_dim, tile_B]   (batch on the lane axis)
    # aw_ref: [h1, in_dim]   ab_ref: [h1, 1]
    # bw_ref: [out_dim, h1]  bb_ref: [out_dim, 1]
    # o_ref : [out_dim, tile_B]
    h = jnp.dot(aw_ref[...], x_ref[...], preferred_element_type=jnp.float32)
    h = jnp.maximum(h + ab_ref[...], 0.0)                      # the single ReLU
    o = jnp.dot(bw_ref[...], h.astype(bw_ref.dtype),
                preferred_element_type=jnp.float32) + bb_ref[...]
    o_ref[...] = o.astype(o_ref.dtype)


def _round_up(n, m):
    return ((n + m - 1) // m) * m


def mlp_forward(x, params, *, batch_tile=1024, compute_dtype=jnp.float32):
    """x: [B, input_dim] float32. params: list of (W [in,out], b [1,out])."""
    B, in_dim = x.shape
    (w1, b1), (w2, b2), (w3, b3), (w4, b4), (w5, b5) = params
    out_dim = w5.shape[1]

    # --- algebraic fold of the linear chains (exact up to fp rounding) ------
    A = w1 @ w2                              # [in, 32]
    a = b1 @ w2 + b2                         # [1, 32]
    Bw = w3 @ w4 @ w5                        # [32, out]
    c = (b3 @ w4 + b4) @ w5 + b5             # [1, out]

    # --- batch-on-lanes layout: compute W^T @ X^T ---------------------------
    A_t = A.T.astype(compute_dtype)          # [32, in]
    a_c = a.T.astype(jnp.float32)            # [32, 1]
    B_t = Bw.T.astype(compute_dtype)         # [out, 32]
    c_c = c.T.astype(jnp.float32)            # [out, 1]
    h1 = A_t.shape[0]

    # Lane-aligned batch tile; pad B up so arbitrary batch sizes work.
    tile = min(_round_up(B, 128), _round_up(batch_tile, 128))
    Bp = _round_up(B, tile)
    x_t = x.T.astype(compute_dtype)          # [in, B]
    if Bp != B:
        x_t = jnp.pad(x_t, ((0, 0), (0, Bp - B)))

    out_t = pl.pallas_call(
        fused_mlp_kernel,
        out_shape=jax.ShapeDtypeStruct((out_dim, Bp), x.dtype),
        grid_spec=pltpu.PrefetchScalarGridSpec(
            num_scalar_prefetch=0,
            grid=(Bp // tile,),
            in_specs=[
                pl.BlockSpec((in_dim, tile), lambda i: (0, i)),   # x^T tile
                pl.BlockSpec((h1, in_dim), lambda i: (0, 0)),     # A^T
                pl.BlockSpec((h1, 1), lambda i: (0, 0)),          # a^T
                pl.BlockSpec((out_dim, h1), lambda i: (0, 0)),    # Bw^T
                pl.BlockSpec((out_dim, 1), lambda i: (0, 0)),     # c^T
            ],
            out_specs=pl.BlockSpec((out_dim, tile), lambda i: (0, i)),
        ),
        compiler_params=pltpu.CompilerParams(
            dimension_semantics=("parallel",)),
    )(x_t, A_t, a_c, B_t, c_c)

    return out_t[:, :B].T                    # back to [B, out_dim]


def init_linear(key, fan_in, fan_out):
    # Deterministic PyTorch-style init: U(-1/sqrt(fan_in), 1/sqrt(fan_in)).
    kw, kb = jax.random.split(key)
    bound = 1.0 / jnp.sqrt(jnp.float32(fan_in))
    w = jax.random.uniform(kw, (fan_in, fan_out), jnp.float32, -bound, bound)
    b = jax.random.uniform(kb, (1, fan_out), jnp.float32, -bound, bound)
    return w, b


def reference_forward(x, params):
    (w1, b1), (w2, b2), (w3, b3), (w4, b4), (w5, b5) = params
    h = x @ w1 + b1
    h = h @ w2 + b2
    h = jnp.maximum(h, 0.0)
    h = h @ w3 + b3
    h = h @ w4 + b4
    h = h @ w5 + b5
    return h


if __name__ == "__main__":
    # Kaggle bike dataset: 8 input features after dropping count/casual/registered,
    # single regression output.
    input_dim, output_dim = 8, 1
    batch = 16  # deliberately NOT a multiple of the tile -> exercises padding path

    key = jax.random.PRNGKey(0)
    kx, k1, k2, k3, k4, k5 = jax.random.split(key, 6)

    x = jax.random.normal(kx, (batch, input_dim), jnp.float32)
    dims = [(input_dim, 64), (64, 32), (32, 16), (16, 8), (8, output_dim)]
    params = [init_linear(k, fi, fo)
              for k, (fi, fo) in zip([k1, k2, k3, k4, k5], dims)]

    out = mlp_forward(x, params)             # f32 compute path
    out = jax.block_until_ready(out)

    ref = reference_forward(x, params)
    assert out.shape == (batch, output_dim)
    assert jnp.allclose(out, ref, atol=1e-4, rtol=1e-4)

    print("KERNEL_OK")
</pallas_src>

<mosaic_0001>
module attributes {stable_mosaic.version = 11 : i64} {
  func.func @fused_mlp_kernel(%arg0: i32, %arg1: memref<8x128xf32, #tpu.memory_space<vmem>>, %arg2: memref<32x8xf32, #tpu.memory_space<vmem>>, %arg3: memref<32x1xf32, #tpu.memory_space<vmem>>, %arg4: memref<1x32xf32, #tpu.memory_space<vmem>>, %arg5: memref<1x1xf32, #tpu.memory_space<vmem>>, %arg6: memref<1x128xf32, #tpu.memory_space<vmem>>) attributes {dimension_semantics = [#tpu.dimension_semantics<parallel>], iteration_bounds = array<i64: 1>, scalar_prefetch = 0 : i64, scratch_operands = 0 : i64, tpu.core_type = #tpu.core_type<tc>, window_params = [{transform_indices = @transform_0, window_bounds = array<i64: 8, 128>}, {pipeline_mode = #tpu.pipeline_mode<synchronous>, transform_indices = @transform_1, window_bounds = array<i64: 32, 8>}, {pipeline_mode = #tpu.pipeline_mode<synchronous>, transform_indices = @transform_2, window_bounds = array<i64: 32, 1>}, {pipeline_mode = #tpu.pipeline_mode<synchronous>, transform_indices = @transform_3, window_bounds = array<i64: 1, 32>}, {pipeline_mode = #tpu.pipeline_mode<synchronous>, transform_indices = @transform_4, window_bounds = array<i64: 1, 1>}, {transform_indices = @transform_5, window_bounds = array<i64: 1, 128>}]} {
    %c0 = arith.constant 0 : index
    %c0_0 = arith.constant 0 : index
    %0 = vector.load %arg2[%c0, %c0_0] : memref<32x8xf32, #tpu.memory_space<vmem>>, vector<32x8xf32>
    %c0_1 = arith.constant 0 : index
    %c0_2 = arith.constant 0 : index
    %1 = vector.load %arg1[%c0_1, %c0_2] : memref<8x128xf32, #tpu.memory_space<vmem>>, vector<8x128xf32>
    %cst = arith.constant dense<0.000000e+00> : vector<32x128xf32>
    %2 = tpu.matmul %0, %1, %cst {dimension_numbers = #tpu.dot_dimension_numbers<[1], [0], [0], [1], [0, 0, 1, 1], [], []>} : vector<32x8xf32>, vector<8x128xf32>, vector<32x128xf32> -> vector<32x128xf32>
    %c0_3 = arith.constant 0 : index
    %c0_4 = arith.constant 0 : index
    %3 = vector.load %arg3[%c0_3, %c0_4] : memref<32x1xf32, #tpu.memory_space<vmem>>, vector<32x1xf32>
    %4 = vector.broadcast %3 : vector<32x1xf32> to vector<32x128xf32>
    %5 = arith.addf %2, %4 : vector<32x128xf32>
    %cst_5 = arith.constant 0.000000e+00 : f32
    %6 = vector.broadcast %cst_5 : f32 to vector<32x128xf32>
    %7 = arith.maximumf %5, %6 : vector<32x128xf32>
    %c0_6 = arith.constant 0 : index
    %c0_7 = arith.constant 0 : index
    %8 = vector.load %arg4[%c0_6, %c0_7] : memref<1x32xf32, #tpu.memory_space<vmem>>, vector<1x32xf32>
    %cst_8 = arith.constant dense<0.000000e+00> : vector<1x128xf32>
    %9 = tpu.matmul %8, %7, %cst_8 {dimension_numbers = #tpu.dot_dimension_numbers<[1], [0], [0], [1], [0, 0, 1, 1], [], []>} : vector<1x32xf32>, vector<32x128xf32>, vector<1x128xf32> -> vector<1x128xf32>
    %c0_9 = arith.constant 0 : index
    %c0_10 = arith.constant 0 : index
    %10 = vector.load %arg5[%c0_9, %c0_10] : memref<1x1xf32, #tpu.memory_space<vmem>>, vector<1x1xf32>
    %11 = vector.broadcast %10 : vector<1x1xf32> to vector<1x128xf32>
    %12 = arith.addf %9, %11 : vector<1x128xf32>
    %c0_11 = arith.constant 0 : index
    %c0_12 = arith.constant 0 : index
    %13 = vector.load %arg6[%c0_11, %c0_12] : memref<1x128xf32, #tpu.memory_space<vmem>>, vector<1x128xf32>
    tpu.vector_store %arg6[%c0_11, %c0_12], %12 {strides = array<i32>} : memref<1x128xf32, #tpu.memory_space<vmem>>, vector<1x128xf32>,
    return
  }
  func.func @transform_0(%arg0: i32) -> (i32, i32) {
    %c0_i32 = arith.constant 0 : i32
    %c0_i32_0 = arith.constant 0 : i32
    return %c0_i32, %arg0 : i32, i32
  }
  func.func @transform_1(%arg0: i32) -> (i32, i32) {
    %c0_i32 = arith.constant 0 : i32
    %c0_i32_0 = arith.constant 0 : i32
    %c0_i32_1 = arith.constant 0 : i32
    return %c0_i32, %c0_i32_0 : i32, i32
  }
  func.func @transform_2(%arg0: i32) -> (i32, i32) {
    %c0_i32 = arith.constant 0 : i32
    %c0_i32_0 = arith.constant 0 : i32
    %c0_i32_1 = arith.constant 0 : i32
    return %c0_i32, %c0_i32_0 : i32, i32
  }
  func.func @transform_3(%arg0: i32) -> (i32, i32) {
    %c0_i32 = arith.constant 0 : i32
    %c0_i32_0 = arith.constant 0 : i32
    %c0_i32_1 = arith.constant 0 : i32
    return %c0_i32, %c0_i32_0 : i32, i32
  }
  func.func @transform_4(%arg0: i32) -> (i32, i32) {
    %c0_i32 = arith.constant 0 : i32
    %c0_i32_0 = arith.constant 0 : i32
    %c0_i32_1 = arith.constant 0 : i32
    return %c0_i32, %c0_i32_0 : i32, i32
  }
  func.func @transform_5(%arg0: i32) -> (i32, i32) {
    %c0_i32 = arith.constant 0 : i32
    %c0_i32_0 = arith.constant 0 : i32
    return %c0_i32, %arg0 : i32, i32
  }
}

</mosaic_0001>

<llo_original>
// kernel: tpu_custom_call.1
$region0: #{tpu_custom_call.1}
  #allocation0 [shape = 'u32[]', space=smem, size = 0x4, offset = 0x4, fixed_abs, tag = 'smem constant byte address 0x4 - core index']
  #allocation1 [shape = 'u32[72,128]{1,0:T(1,128)}', space=vmem, size = 0x9000, scoped, tag = 'internal scratch']
  #allocation2 [shape = 'f32[1,1]{1,0:T(1,128)S(1)}', space=vmem, size = 0x200, scoped, tag = 'scoped memory for tpu_custom_call.1']
  %s0 = inlined_call_operand.vmem [shape: f32[8,128], index: 0, kind: input, shape index: {}]
  %s1 = inlined_call_operand.vmem [shape: f32[32,8], index: 1, kind: input, shape index: {}]
  %s2 = inlined_call_operand.vmem [shape: f32[32,1], index: 2, kind: input, shape index: {}]
  %s3 = inlined_call_operand.vmem [shape: f32[1,32], index: 3, kind: input, shape index: {}]
  %s4 = inlined_call_operand.<no memory space> [shape: f32[1,1], index: 4, kind: input, shape index: {}]
  %s5 = inlined_call_operand.hbm [shape: f32[1,128], index: 5, kind: output, shape index: {}]
  %s6 = sld [smem:[#allocation0]]
  $region30: #{tpu_custom_call.1} parent=0
    _
  %s8 = ssub.s32 1, %s6
  %s9 = scalar_select 0, %s8, %s6
  %v10 = vstv %s4
  %11 = vst [vmem:[#allocation2] sm:$0x1] %v10
  $region1: #{tpu_custom_call.1} parent=0
    #allocation3 [shape = 'u8[512]{0}', space=vmem, size = 0x400, scoped, tag = 'output window, operand 0, single buffered']
    #allocation4 [shape = 's32[1]{0}', space=sflag, size = 0x4, scoped, tag = 'scoped memory for tpu_custom_call.1']
    %12 = vsyncpa [#allocation4], 0
    // Predicated region
    $region2: #{tpu_custom_call.1} parent=1 // pred_check
      _
    $region3: #{tpu_custom_call.1} parent=1 // pred_check_branch
      %14 = sbr.rel (0) target = $region5
    $region4: #{tpu_custom_call.1} parent=1 // pred_region
      _
    $region5: #{tpu_custom_call.1} parent=1 // pred_fallthru
      _
    // Predicated region
    $region6: #{tpu_custom_call.1} parent=1 // pred_check
      _
    $region7: #{tpu_custom_call.1} parent=1 // pred_check_branch
      %16 = sbr.rel (0) target = $region9
    $region8: #{tpu_custom_call.1} parent=1 // pred_region
      _
    $region9: #{tpu_custom_call.1} parent=1 // pred_fallthru
      _
    // Predicated region
    $region10: #{tpu_custom_call.1} parent=1 // pred_check
      _
    $region11: #{tpu_custom_call.1} parent=1 // pred_check_branch
      %18 = sbr.rel (0) target = $region13
    $region12: #{tpu_custom_call.1} parent=1 // pred_region
      _
    $region13: #{tpu_custom_call.1} parent=1 // pred_fallthru
      _
    // Predicated region
    $region14: #{tpu_custom_call.1} parent=1 // pred_check
      _
    $region15: #{tpu_custom_call.1} parent=1 // pred_check_branch
      %20 = sbr.rel (0) target = $region17
    $region16: #{tpu_custom_call.1} parent=1 // pred_region
      _
    $region17: #{tpu_custom_call.1} parent=1 // pred_fallthru
      _
    // Predicated region
    $region18: #{tpu_custom_call.1} parent=1 // pred_check
      _
    $region19: #{tpu_custom_call.1} parent=1 // pred_check_branch
      %22 = sbr.rel (0) target = $region21
    $region20: #{tpu_custom_call.1} parent=1 // pred_region
      _
    $region21: #{tpu_custom_call.1} parent=1 // pred_fallthru
      _
    %v23 = vld [vmem:[%s1] sm:$0xff]
    %v24 = vld [vmem:[%s1 + $0x8] sm:$0xff]
    %v25 = vld [vmem:[%s1 + $0x10] sm:$0xff]
    %v26 = vld [vmem:[%s1 + $0x18] sm:$0xff]
    %v27 = vld [vmem:[%s0] sm:$0xff]
    %v28 = vld [vmem:[%s2] sm:$0xff]
    %v29 = vld [vmem:[%s2 + $0x8] sm:$0xff]
    %v30 = vld [vmem:[%s2 + $0x10] sm:$0xff]
    %v31 = vld [vmem:[%s2 + $0x18] sm:$0xff]
    %33 = vset.pattern.permute.xlu0 0
    %34 = vperm.xlu0 %33, %v28
    %v35 = vpop.permute.xlu0 %34
    %38 = vset.pattern.permute.xlu0 0
    %39 = vperm.xlu0 %38, %v29
    %v40 = vpop.permute.xlu0 %39
    %43 = vset.pattern.permute.xlu0 0
    %44 = vperm.xlu0 %43, %v30
    %v45 = vpop.permute.xlu0 %44
    %48 = vset.pattern.permute.xlu0 0
    %49 = vperm.xlu0 %48, %v31
    %v50 = vpop.permute.xlu0 %49
    %vm52 = vcmask 64512
    %v54 = vsel %vm52, %v23, 0
    %v57 = vsel %vm52, %v24, 0
    %v60 = vsel %vm52, %v25, 0
    %v63 = vsel %vm52, %v26, 0
    %65 = vmatpush.msra.mxu0 0.0
    %66 = vmatpush.msra.mxu0 0.0
    %67 = vmatpush.msra.mxu0 0.0
    %68 = vmatpush.msra.mxu0 0.0
    %69 = vmatpush.msra.mxu0 0.0
    %70 = vmatpush.msra.mxu0 0.0
    %71 = vmatpush.msra.mxu0 0.0
    %72 = vmatpush.msra.mxu0 0.0
    %73 = vmatpush.msra.mxu0 0.0
    %74 = vmatpush.msra.mxu0 0.0
    %75 = vmatpush.msra.mxu0 0.0
    %76 = vmatpush.msra.mxu0 0.0
    %77 = vmatpush.msra.mxu0 0.0
    %78 = vmatpush.msra.mxu0 0.0
    %79 = vmatpush.msra.mxu0 0.0
    %80 = vmatpush.msra.mxu0 %v27
    %81 = vmatmul.f32.gmra.mxu0 %v54
    %v82 = vpop.f32.mrf.mxu0
    %v83 = vadd.f32 %v35, %v82
    %84 = vmatmul.f32.gmra.mxu0 %v57
    %v85 = vpop.f32.mrf.mxu0
    %v86 = vadd.f32 %v40, %v85
    %87 = vmatmul.f32.gmra.mxu0 %v60
    %v88 = vpop.f32.mrf.mxu0
    %v89 = vadd.f32 %v45, %v88
    %90 = vmatmul.f32.gmra.mxu0 %v63
    %v91 = vpop.f32.mrf.mxu0
    %v92 = vadd.f32 %v50, %v91
    %93 = vdwg.mxu0
    %v94 = vmax.f32 %v83, 0.0
    %v95 = vmax.f32 %v86, 0.0
    %v96 = vmax.f32 %v89, 0.0
    %v97 = vmax.f32 %v92, 0.0
    %v98 = vld [vmem:[%s3] sm:$0x1]
    %v99 = vld [vmem:[#allocation2] sm:$0x1]
    %101 = vset.pattern.permute.xlu0 0
    %102 = vperm.xlu0 %101, %v99
    %v103 = vpop.permute.xlu0 %102
    %v105 = vperm.slane %v103, 0
    %vm106 = vcmask 261120
    %v108 = vsel %vm106, %v98, 0
    %110 = vmatpush.msra.mxu0 0.0
    %111 = vmatpush.msra.mxu0 0.0
    %112 = vmatpush.msra.mxu0 0.0
    %113 = vmatpush.msra.mxu0 0.0
    %114 = vmatpush.msra.mxu0 0.0
    %115 = vmatpush.msra.mxu0 0.0
    %116 = vmatpush.msra.mxu0 0.0
    %117 = vmatpush.msra.mxu0 0.0
    %118 = vmatpush.msra.mxu0 0.0
    %119 = vmatpush.msra.mxu0 0.0
    %120 = vmatpush.msra.mxu0 0.0
    %121 = vmatpush.msra.mxu0 0.0
    %122 = vmatpush.msra.mxu0 %v97
    %123 = vmatpush.msra.mxu0 %v96
    %124 = vmatpush.msra.mxu0 %v95
    %125 = vmatpush.msra.mxu0 %v94
    %126 = vmatmul.f32.gmra.mxu0 %v108
    %v127 = vpop.f32.mrf.mxu0
    %v128 = vadd.f32 %v105, %v127
    %129 = vdwg.mxu0
    %130 = vst [vmem:[#allocation3] sm:$0x1] %v128
    // Predicated region
    $region22: #{tpu_custom_call.1} parent=1 // pred_check
      _
    $region23: #{tpu_custom_call.1} parent=1 // pred_check_branch
      %132 = sbr.rel (0) target = $region25
    $region24: #{tpu_custom_call.1} parent=1 // pred_region
      %134 = vsyncadd [#allocation4], 0
      %s136 = sshll.u32 [#allocation3], 4
      %s137 = int_to_ptr.vmem [resolvable:$true] %s136
      %s138 = sshll.u32 %s5, 4
      %s139 = int_to_ptr.hbm [resolvable:$true] %s138
      %141 = dma.vmem_to_hbm [thread:$0]  %s137, 16, %s139, [#allocation4]
    $region25: #{tpu_custom_call.1} parent=1 // pred_fallthru
      _
    // Predicated region
    $region26: #{tpu_custom_call.1} parent=1 // pred_check
      _
    $region27: #{tpu_custom_call.1} parent=1 // pred_check_branch
      %143 = sbr.rel (0) target = $region29
    $region28: #{tpu_custom_call.1} parent=1 // pred_region
      %145 = dma.done [#allocation4], 16
    $region29: #{tpu_custom_call.1} parent=1 // pred_fallthru
      _
    %146 = vsyncpa [#allocation4], 1

</llo_original>
